<compile_context>
chip_gen: v7x
topology: tpu7x:2x2x1
jax: 0.10.0
libtpu: 0.0.40
codegen_flags: <defaults>
</compile_context>

<pallas_src>
import functools
import math

import jax
import jax.numpy as jnp
import numpy as np
from jax import lax
from jax.experimental import pallas as pl
from jax.experimental.pallas import tpu as pltpu

_INT32_MAX = np.int32(2**31 - 1)
_FORI_MIN_K = 8   # use lax.fori_loop(unroll=True) for the merge when k >= this


def _round_up(v, m):
    return ((v + m - 1) // m) * m


def _knn_topk_kernel(xsum_ref, packed_ref, out_ref, best_sc, *,
                     k, n_classes, cls_bits, low_bits, max_high):
    """Streaming top-k over N blocks; vote + argmax at the last block."""
    ni = pl.program_id(1)
    n_steps = pl.num_programs(1)
    bblk = xsum_ref.shape[0]

    @pl.when(ni == 0)
    def _init():
        best_sc[...] = jnp.full(best_sc.shape, _INT32_MAX, jnp.int32)

    # ---- distance keys for this N block --------------------------------
    # torch distance sqrt((sum_f(x-feat))^2 + 1e-6) is strictly monotone in
    # |sum_f x - sum_f feat|, so ranking on |diff| selects the same neighbors.
    fsum = pltpu.bitcast(packed_ref[0:1, :], jnp.float32)     # (1, n_blk)
    tag = packed_ref[1:2, :]                                  # (1, n_blk) int32
    diff = jnp.abs(xsum_ref[...] - fsum)                      # (bblk, n_blk) >= 0
    dbits = jnp.minimum(pltpu.bitcast(diff, jnp.int32),       # order-preserving
                        jnp.int32(max_high))                  # never hits sentinel
    high_mask = jnp.int32(~((1 << low_bits) - 1))
    keys = (dbits & high_mask) | tag                          # unique, < INT32_MAX

    # ---- threshold gate: does this block improve the running k-best? ----
    best0 = best_sc[...]                                      # (bblk, k)
    thresh = jnp.max(best0, axis=1, keepdims=True)            # per-row worst kept
    rowmin = jnp.min(keys, axis=1, keepdims=True)             # (bblk, 1)
    improves = jnp.max(jnp.where(rowmin < thresh, 1, 0)) > 0  # scalar

    @pl.when(improves)
    def _merge():
        # k minima over union(carried best, block keys); keys/best values are
        # disjoint & unique, so each step identifies exactly one candidate.
        # Extracted block keys are skipped via "keys > m_prev" (no full-tile
        # writeback of the keys tile).
        slot = lax.broadcasted_iota(jnp.int32, (bblk, k), 1)

        def body(j, carry):
            best, new_best, m_prev = carry
            kmin = jnp.min(jnp.where(keys > m_prev, keys, _INT32_MAX),
                           axis=1, keepdims=True)
            m = jnp.minimum(kmin, jnp.min(best, axis=1, keepdims=True))
            new_best = jnp.where(slot == j, m, new_best)
            best = jnp.where(best == m, _INT32_MAX, best)
            return best, new_best, m

        carry = (best0,
                 jnp.full((bblk, k), _INT32_MAX, jnp.int32),
                 jnp.full((bblk, 1), -1, jnp.int32))
        if k < _FORI_MIN_K:
            for j in range(k):
                carry = body(j, carry)
        else:
            carry = lax.fori_loop(0, k, body, carry, unroll=True)
        best_sc[...] = carry[1]

    # ---- finalize: decode classes, vote, argmax --------------------------
    @pl.when(ni == n_steps - 1)
    def _finalize():
        sel_cls = best_sc[...] & jnp.int32((1 << cls_bits) - 1)  # (bblk, k)
        ci = lax.broadcasted_iota(jnp.int32, (bblk, n_classes), 1)
        votes = jnp.zeros((bblk, n_classes), jnp.int32)
        for j in range(k):        # finalize runs once per B block; k is small
            votes = votes + (sel_cls[:, j:j + 1] == ci).astype(jnp.int32)
        vmax = jnp.max(votes, axis=1, keepdims=True)
        cls_idx = jnp.min(jnp.where(votes == vmax, ci, n_classes),
                          axis=1, keepdims=True)                 # first occurrence
        out_ref[...] = jnp.broadcast_to(cls_idx, out_ref.shape).astype(jnp.int32)


def make_onehot(labels, n_classes):
    labels = jnp.asarray(labels).reshape(-1).astype(jnp.int32)
    return jax.nn.one_hot(labels, n_classes, dtype=jnp.float32)


class KNN:
    """JAX/Pallas port of the torch KNN module."""

    def __init__(self, features, labels, k, labels_onehot=False,
                 n_block=4096, b_block=128):
        features = jnp.asarray(features, jnp.float32)
        if features.ndim == 2:
            features = features[None]
        elif features.ndim > 3:
            raise ValueError("features must be 2D or 3D")
        self.features = features                               # (1, N, F)

        labels = jnp.asarray(labels)
        if not labels_onehot:
            n_classes = int(labels.max()) + 1
            cls_ids = labels.reshape(-1).astype(jnp.int32)
            labels_oh = make_onehot(cls_ids, n_classes)
        else:
            labels_oh = labels.astype(jnp.float32)
            n_classes = labels_oh.shape[-1]
            cls_ids = jnp.argmax(labels_oh, axis=-1).reshape(-1).astype(jnp.int32)
        self.labels = labels_oh[None]                           # (1, N, C)
        self.labels_onehot = labels_onehot
        self.n_classes = int(n_classes)
        self.k = int(k)

        feats = self.features[0]
        N, F = feats.shape
        self.n_feat = int(F)
        self.n_train = int(N)
        self.k_eff = max(1, min(self.k, N))   # torch argsort[:k] clamps to N

        # ---- one-time constant preprocessing (not per forward) ----------
        n_blk = min(int(n_block), _round_up(N, 128))
        n_pad = _round_up(N, n_blk)
        cls_bits = max(1, int(math.ceil(math.log2(max(self.n_classes, 2)))))
        idx_bits = max(1, int(math.ceil(math.log2(max(n_pad, 2)))))
        low_bits = idx_bits + cls_bits
        if low_bits > 23:
            raise ValueError("n_train * n_classes too large for the packed-key trick")
        assert self.k_eff <= n_pad, "k must not exceed padded training size"

        fsum = jnp.sum(feats, axis=-1)                 # (N,): F x less DMA than feats
        fsum_pad = jnp.full((n_pad,), jnp.inf, jnp.float32).at[:N].set(fsum)
        cls_pad = jnp.zeros((n_pad,), jnp.int32).at[:N].set(cls_ids)
        gidx = jnp.arange(n_pad, dtype=jnp.int32)
        tag = (gidx << cls_bits) | cls_pad             # precomputed packed tag
        # Row 0: feature-sum bits, row 1: index/class tag -> one strip per DMA.
        self._packed = jnp.stack(
            [lax.bitcast_convert_type(fsum_pad, jnp.int32), tag], axis=0)

        self._n_blk = n_blk
        self._n_pad = n_pad
        self._cls_bits = cls_bits
        self._low_bits = low_bits
        # Largest allowed high part so (high | any_tag) < INT32_MAX (sentinel-safe).
        self._max_high = ((0x7FFFFFFF >> low_bits) - 1) << low_bits
        self._b_block = int(b_block)

    def __call__(self, x):
        x = jnp.asarray(x, jnp.float32)
        if x.ndim == 1:
            x = x[None, :]
        B, F = x.shape
        if F != self.n_feat:
            raise ValueError("feature dimension mismatch")

        # The kernel only needs sum_f(x): reduce in the wrapper (fused XLA op).
        xsum = jnp.sum(x, axis=-1, keepdims=True)               # (B, 1)

        b_blk = min(self._b_block, _round_up(B, 8))
        # Ensure >= 2 B blocks whenever possible so the "parallel" axis can
        # shard across both v7x TensorCores (no effect on single-TC chips).
        half = _round_up(max(1, -(-B // 2)), 8)
        b_blk = max(8, min(b_blk, half))
        b_pad = _round_up(B, b_blk)
        xsum_pad = jnp.zeros((b_pad, 1), jnp.float32).at[:B].set(xsum)

        k = self.k_eff
        C = self.n_classes
        n_blk = self._n_blk
        grid = (b_pad // b_blk, self._n_pad // n_blk)

        kernel = functools.partial(
            _knn_topk_kernel, k=k, n_classes=C,
            cls_bits=self._cls_bits, low_bits=self._low_bits,
            max_high=self._max_high)

        flops = b_pad * self._n_pad * (5 + 3 * k)
        bytes_accessed = (grid[0] * self._n_pad * 8          # packed strips per B block
                          + b_pad * 4 + b_pad * 128 * 4)

        out = pl.pallas_call(
            kernel,
            out_shape=jax.ShapeDtypeStruct((b_pad, 128), jnp.int32),
            grid_spec=pltpu.PrefetchScalarGridSpec(
                num_scalar_prefetch=0,
                grid=grid,
                in_specs=[
                    pl.BlockSpec((b_blk, 1), lambda bi, ni: (bi, 0)),
                    pl.BlockSpec((2, n_blk), lambda bi, ni: (0, ni)),
                ],
                out_specs=pl.BlockSpec((b_blk, 128), lambda bi, ni: (bi, 0)),
                scratch_shapes=[
                    pltpu.VMEM((b_blk, k), jnp.int32),     # running k-best keys
                ],
            ),
            compiler_params=pltpu.CompilerParams(
                dimension_semantics=("parallel", "arbitrary"),
                vmem_limit_bytes=32 * 1024 * 1024),
            cost_estimate=pl.CostEstimate(
                flops=int(flops), transcendentals=0,
                bytes_accessed=int(bytes_accessed)),
        )(xsum_pad, self._packed)

        cls = out[:B, 0]                                   # (B,)
        # torch semantics: labels expanded to batch then fancy-indexed gives a
        # (B, B) result where res[i, j] is the class of query j.
        res = jnp.broadcast_to(cls[None, :], (B, B))
        if self.labels_onehot:
            res = jax.nn.one_hot(res.reshape(-1), C, dtype=jnp.float32)
        if res.shape[0] == 1:   # torch code unconditionally does .squeeze(0)
            res = res[0]
        return res


def _reference_forward(x, features, labels_oh, k):
    """Pure-jnp mirror of the torch forward (for verification)."""
    xq = x[:, None, :]                                           # (B, 1, F)
    d = jnp.sqrt(((xq - features).sum(-1)) ** 2 + 1e-6)          # (B, N)
    idx = jnp.argsort(d, axis=-1)[..., :k]                       # (B, k)
    labels = jnp.broadcast_to(labels_oh, (x.shape[0],) + labels_oh.shape[1:])
    votes = labels[:, idx]                                       # (B, B, k, C)
    cls = jnp.argmax(votes.sum(-2), axis=-1)                     # (B, B)
    if cls.shape[0] == 1:
        cls = cls[0]
    return cls


if __name__ == "__main__":
    key = jax.random.PRNGKey(0)
    kf, kl, kx, kf2, kl2, kx2 = jax.random.split(key, 6)

    # ---- test 1: tiny random problem (single N block, single B block) ----
    N, F, C, B, k = 16, 8, 3, 2, 3
    train_features = jax.random.normal(kf, (N, F), dtype=jnp.float32)
    train_labels = jax.random.randint(kl, (N,), 0, C)
    x = jax.random.normal(kx, (B, F), dtype=jnp.float32)

    knn = KNN(train_features, train_labels, k)
    out = jax.block_until_ready(knn(x))
    ref = _reference_forward(x, knn.features, knn.labels, k)
    assert out.shape == ref.shape, (out.shape, ref.shape)
    np.testing.assert_array_equal(np.asarray(out), np.asarray(ref))

    # one-hot output path (wrapper-only logic)
    knn_oh = KNN(train_features, jax.nn.one_hot(train_labels, C), k,
                 labels_onehot=True)
    out_oh = jax.block_until_ready(knn_oh(x))
    np.testing.assert_array_equal(
        np.asarray(out_oh),
        np.asarray(jax.nn.one_hot(jnp.asarray(out).reshape(-1), C)))

    # ---- test 2: multiple N blocks AND multiple B blocks (exercises the
    # streaming k-best carry, the threshold gate, and the 2-block parallel
    # B axis).  Feature sums are well separated by construction so the
    # packed-key low-bit tie-break cannot change the result. ---------------
    N2, F2, C2, B2, k2 = 300, 8, 4, 12, 5
    feat_noise = 0.001 * jax.random.normal(kf2, (N2, F2), dtype=jnp.float32)
    train_features2 = feat_noise.at[:, 0].add(
        jnp.arange(N2, dtype=jnp.float32))              # row sums ~= 0..N2-1
    train_labels2 = jax.random.randint(kl2, (N2,), 0, C2)
    x_noise = 0.001 * jax.random.normal(kx2, (B2, F2), dtype=jnp.float32)
    query_offsets = 3.3 + 25.0 * jnp.arange(B2, dtype=jnp.float32)  # frac .3
    x2 = x_noise.at[:, 0].add(query_offsets)

    knn2 = KNN(train_features2, train_labels2, k2, n_block=128)
    out2 = jax.block_until_ready(knn2(x2))
    ref2 = _reference_forward(x2, knn2.features, knn2.labels, k2)
    assert out2.shape == ref2.shape, (out2.shape, ref2.shape)
    np.testing.assert_array_equal(np.asarray(out2), np.asarray(ref2))

    print("KERNEL_OK")
</pallas_src>

<mosaic_0001>
module attributes {stable_mosaic.version = 11 : i64} {
  func.func @_knn_topk_kernel(%arg0: i32, %arg1: i32, %arg2: memref<8x1xf32, #tpu.memory_space<vmem>>, %arg3: memref<2x128xi32, #tpu.memory_space<vmem>>, %arg4: memref<8x128xi32, #tpu.memory_space<vmem>>, %arg5: memref<8x3xi32, #tpu.memory_space<vmem>>) attributes {dimension_semantics = [#tpu.dimension_semantics<parallel>, #tpu.dimension_semantics<arbitrary>], iteration_bounds = array<i64: 1, 1>, scalar_prefetch = 0 : i64, scratch_operands = 1 : i64, tpu.core_type = #tpu.core_type<tc>, window_params = [{transform_indices = @transform_0, window_bounds = array<i64: 8, 1>}, {transform_indices = @transform_1, window_bounds = array<i64: 2, 128>}, {transform_indices = @transform_2, window_bounds = array<i64: 8, 128>}]} {
    %c0_i32 = arith.constant 0 : i32
    %0 = arith.cmpi eq, %arg1, %c0_i32 : i32
    %1 = arith.extui %0 : i1 to i32
    %c0_i32_0 = arith.constant 0 : i32
    %2 = arith.cmpi ne, %1, %c0_i32_0 : i32
    scf.if %2 {
      %c2147483647_i32 = arith.constant 2147483647 : i32
      %37 = vector.broadcast %c2147483647_i32 : i32 to vector<8x3xi32>
      %c0_14 = arith.constant 0 : index
      %c0_15 = arith.constant 0 : index
      %38 = vector.load %arg5[%c0_14, %c0_15] : memref<8x3xi32, #tpu.memory_space<vmem>>, vector<8x3xi32>
      tpu.vector_store %arg5[%c0_14, %c0_15], %37 {strides = array<i32>} : memref<8x3xi32, #tpu.memory_space<vmem>>, vector<8x3xi32>,
    } else {
    }
    %c0 = arith.constant 0 : index
    %c0_1 = arith.constant 0 : index
    %3 = vector.load %arg3[%c0, %c0_1] : memref<2x128xi32, #tpu.memory_space<vmem>>, vector<1x128xi32>
    %4 = tpu.bitcast %3 : vector<1x128xi32> -> vector<1x128xf32>
    %c1 = arith.constant 1 : index
    %c0_2 = arith.constant 0 : index
    %5 = vector.load %arg3[%c1, %c0_2] : memref<2x128xi32, #tpu.memory_space<vmem>>, vector<1x128xi32>
    %c0_3 = arith.constant 0 : index
    %c0_4 = arith.constant 0 : index
    %6 = vector.load %arg2[%c0_3, %c0_4] : memref<8x1xf32, #tpu.memory_space<vmem>>, vector<8x1xf32>
    %7 = vector.broadcast %6 : vector<8x1xf32> to vector<8x128xf32>
    %8 = vector.broadcast %4 : vector<1x128xf32> to vector<8x128xf32>
    %9 = arith.subf %7, %8 : vector<8x128xf32>
    %10 = math.absf %9 : vector<8x128xf32>
    %11 = tpu.bitcast %10 : vector<8x128xf32> -> vector<8x128xi32>
    %c2147482624_i32 = arith.constant 2147482624 : i32
    %12 = vector.broadcast %c2147482624_i32 : i32 to vector<8x128xi32>
    %13 = arith.minsi %11, %12 : vector<8x128xi32>
    %c-512_i32 = arith.constant -512 : i32
    %14 = vector.broadcast %c-512_i32 : i32 to vector<8x128xi32>
    %15 = arith.andi %13, %14 : vector<8x128xi32>
    %16 = vector.broadcast %5 : vector<1x128xi32> to vector<8x128xi32>
    %17 = arith.ori %15, %16 : vector<8x128xi32>
    %c0_5 = arith.constant 0 : index
    %c0_6 = arith.constant 0 : index
    %18 = vector.load %arg5[%c0_5, %c0_6] : memref<8x3xi32, #tpu.memory_space<vmem>>, vector<8x3xi32>
    %cst = arith.constant dense<-2147483648> : vector<8xi32>
    %19 = vector.multi_reduction <maxsi>, %18, %cst [1] : vector<8x3xi32> to vector<8xi32>
    %20 = vector.shape_cast %19 : vector<8xi32> to vector<8x1xi32>
    %cst_7 = arith.constant dense<2147483647> : vector<8xi32>
    %21 = vector.multi_reduction <minsi>, %17, %cst_7 [1] : vector<8x128xi32> to vector<8xi32>
    %22 = vector.shape_cast %21 : vector<8xi32> to vector<8x1xi32>
    %23 = arith.cmpi slt, %22, %20 : vector<8x1xi32>
    %c1_i32 = arith.constant 1 : i32
    %c0_i32_8 = arith.constant 0 : i32
    %24 = vector.broadcast %c1_i32 : i32 to vector<8x1xi32>
    %25 = vector.broadcast %c0_i32_8 : i32 to vector<8x1xi32>
    %26 = arith.select %23, %24, %25 : vector<8x1xi1>, vector<8x1xi32>
    %27 = vector.shape_cast %26 : vector<8x1xi32> to vector<1x8x1xi32>
    %cst_9 = arith.constant dense<-2147483648> : vector<1xi32>
    %28 = vector.multi_reduction <maxsi>, %27, %cst_9 [1, 2] : vector<1x8x1xi32> to vector<1xi32>
    %29 = vector.shape_cast %28 : vector<1xi32> to vector<1x1x1xi32>
    %30 = vector.extract %29[0, 0, 0] : i32 from vector<1x1x1xi32>
    %c0_i32_10 = arith.constant 0 : i32
    %31 = arith.cmpi sgt, %30, %c0_i32_10 : i32
    %32 = arith.extui %31 : i1 to i32
    %c0_i32_11 = arith.constant 0 : i32
    %33 = arith.cmpi ne, %32, %c0_i32_11 : i32
    scf.if %33 {
      %37 = tpu.iota {dimensions = array<i32: 1>} : vector<8x3xi32>
      %c2147483647_i32 = arith.constant 2147483647 : i32
      %38 = vector.broadcast %c2147483647_i32 : i32 to vector<8x3xi32>
      %c-1_i32 = arith.constant -1 : i32
      %39 = vector.broadcast %c-1_i32 : i32 to vector<8x1xi32>
      %40 = vector.broadcast %39 : vector<8x1xi32> to vector<8x128xi32>
      %41 = arith.cmpi sgt, %17, %40 : vector<8x128xi32>
      %c2147483647_i32_14 = arith.constant 2147483647 : i32
      %42 = vector.broadcast %c2147483647_i32_14 : i32 to vector<8x128xi32>
      %43 = arith.select %41, %17, %42 : vector<8x128xi1>, vector<8x128xi32>
      %cst_15 = arith.constant dense<2147483647> : vector<8xi32>
      %44 = vector.multi_reduction <minsi>, %43, %cst_15 [1] : vector<8x128xi32> to vector<8xi32>
      %45 = vector.shape_cast %44 : vector<8xi32> to vector<8x1xi32>
      %cst_16 = arith.constant dense<2147483647> : vector<8xi32>
      %46 = vector.multi_reduction <minsi>, %18, %cst_16 [1] : vector<8x3xi32> to vector<8xi32>
      %47 = vector.shape_cast %46 : vector<8xi32> to vector<8x1xi32>
      %48 = arith.minsi %45, %47 : vector<8x1xi32>
      %c0_i32_17 = arith.constant 0 : i32
      %49 = vector.broadcast %c0_i32_17 : i32 to vector<8x3xi32>
      %50 = arith.cmpi eq, %37, %49 : vector<8x3xi32>
      %51 = vector.shape_cast %48 : vector<8x1xi32> to vector<8x1xi32>
      %52 = vector.broadcast %51 : vector<8x1xi32> to vector<8x3xi32>
      %53 = arith.select %50, %52, %38 : vector<8x3xi1>, vector<8x3xi32>
      %54 = vector.broadcast %48 : vector<8x1xi32> to vector<8x3xi32>
      %55 = arith.cmpi eq, %18, %54 : vector<8x3xi32>
      %c2147483647_i32_18 = arith.constant 2147483647 : i32
      %56 = vector.broadcast %c2147483647_i32_18 : i32 to vector<8x3xi32>
      %57 = arith.select %55, %56, %18 : vector<8x3xi1>, vector<8x3xi32>
      %58 = vector.broadcast %48 : vector<8x1xi32> to vector<8x128xi32>
      %59 = arith.cmpi sgt, %17, %58 : vector<8x128xi32>
      %c2147483647_i32_19 = arith.constant 2147483647 : i32
      %60 = vector.broadcast %c2147483647_i32_19 : i32 to vector<8x128xi32>
      %61 = arith.select %59, %17, %60 : vector<8x128xi1>, vector<8x128xi32>
      %cst_20 = arith.constant dense<2147483647> : vector<8xi32>
      %62 = vector.multi_reduction <minsi>, %61, %cst_20 [1] : vector<8x128xi32> to vector<8xi32>
      %63 = vector.shape_cast %62 : vector<8xi32> to vector<8x1xi32>
      %cst_21 = arith.constant dense<2147483647> : vector<8xi32>
      %64 = vector.multi_reduction <minsi>, %57, %cst_21 [1] : vector<8x3xi32> to vector<8xi32>
      %65 = vector.shape_cast %64 : vector<8xi32> to vector<8x1xi32>
      %66 = arith.minsi %63, %65 : vector<8x1xi32>
      %c1_i32_22 = arith.constant 1 : i32
      %67 = vector.broadcast %c1_i32_22 : i32 to vector<8x3xi32>
      %68 = arith.cmpi eq, %37, %67 : vector<8x3xi32>
      %69 = vector.shape_cast %66 : vector<8x1xi32> to vector<8x1xi32>
      %70 = vector.broadcast %69 : vector<8x1xi32> to vector<8x3xi32>
      %71 = arith.select %68, %70, %53 : vector<8x3xi1>, vector<8x3xi32>
      %72 = vector.broadcast %66 : vector<8x1xi32> to vector<8x3xi32>
      %73 = arith.cmpi eq, %57, %72 : vector<8x3xi32>
      %c2147483647_i32_23 = arith.constant 2147483647 : i32
      %74 = vector.broadcast %c2147483647_i32_23 : i32 to vector<8x3xi32>
      %75 = arith.select %73, %74, %57 : vector<8x3xi1>, vector<8x3xi32>
      %76 = vector.broadcast %66 : vector<8x1xi32> to vector<8x128xi32>
      %77 = arith.cmpi sgt, %17, %76 : vector<8x128xi32>
      %c2147483647_i32_24 = arith.constant 2147483647 : i32
      %78 = vector.broadcast %c2147483647_i32_24 : i32 to vector<8x128xi32>
      %79 = arith.select %77, %17, %78 : vector<8x128xi1>, vector<8x128xi32>
      %cst_25 = arith.constant dense<2147483647> : vector<8xi32>
      %80 = vector.multi_reduction <minsi>, %79, %cst_25 [1] : vector<8x128xi32> to vector<8xi32>
      %81 = vector.shape_cast %80 : vector<8xi32> to vector<8x1xi32>
      %cst_26 = arith.constant dense<2147483647> : vector<8xi32>
      %82 = vector.multi_reduction <minsi>, %75, %cst_26 [1] : vector<8x3xi32> to vector<8xi32>
      %83 = vector.shape_cast %82 : vector<8xi32> to vector<8x1xi32>
      %84 = arith.minsi %81, %83 : vector<8x1xi32>
      %c2_i32 = arith.constant 2 : i32
      %85 = vector.broadcast %c2_i32 : i32 to vector<8x3xi32>
      %86 = arith.cmpi eq, %37, %85 : vector<8x3xi32>
      %87 = vector.shape_cast %84 : vector<8x1xi32> to vector<8x1xi32>
      %88 = vector.broadcast %87 : vector<8x1xi32> to vector<8x3xi32>
      %89 = arith.select %86, %88, %71 : vector<8x3xi1>, vector<8x3xi32>
      %c0_27 = arith.constant 0 : index
      %c0_28 = arith.constant 0 : index
      %90 = vector.load %arg5[%c0_27, %c0_28] : memref<8x3xi32, #tpu.memory_space<vmem>>, vector<8x3xi32>
      tpu.vector_store %arg5[%c0_27, %c0_28], %89 {strides = array<i32>} : memref<8x3xi32, #tpu.memory_space<vmem>>, vector<8x3xi32>,
    } else {
    }
    %c0_i32_12 = arith.constant 0 : i32
    %34 = arith.cmpi eq, %arg1, %c0_i32_12 : i32
    %35 = arith.extui %34 : i1 to i32
    %c0_i32_13 = arith.constant 0 : i32
    %36 = arith.cmpi ne, %35, %c0_i32_13 : i32
    scf.if %36 {
      %c0_14 = arith.constant 0 : index
      %c0_15 = arith.constant 0 : index
      %37 = vector.load %arg5[%c0_14, %c0_15] : memref<8x3xi32, #tpu.memory_space<vmem>>, vector<8x3xi32>
      %c3_i32 = arith.constant 3 : i32
      %38 = vector.broadcast %c3_i32 : i32 to vector<8x3xi32>
      %39 = arith.andi %37, %38 : vector<8x3xi32>
      %40 = tpu.iota {dimensions = array<i32: 1>} : vector<8x3xi32>
      %c0_i32_16 = arith.constant 0 : i32
      %41 = vector.broadcast %c0_i32_16 : i32 to vector<8x3xi32>
      %42 = vector.extract_strided_slice %39 {offsets = [0, 0], sizes = [8, 1], strides = [1, 1]} : vector<8x3xi32> to vector<8x1xi32>
      %43 = vector.broadcast %42 : vector<8x1xi32> to vector<8x3xi32>
      %44 = arith.cmpi eq, %43, %40 : vector<8x3xi32>
      %45 = arith.extui %44 : vector<8x3xi1> to vector<8x3xi32>
      %46 = arith.addi %41, %45 : vector<8x3xi32>
      %47 = vector.extract_strided_slice %39 {offsets = [0, 1], sizes = [8, 1], strides = [1, 1]} : vector<8x3xi32> to vector<8x1xi32>
      %48 = vector.broadcast %47 : vector<8x1xi32> to vector<8x3xi32>
      %49 = arith.cmpi eq, %48, %40 : vector<8x3xi32>
      %50 = arith.extui %49 : vector<8x3xi1> to vector<8x3xi32>
      %51 = arith.addi %46, %50 : vector<8x3xi32>
      %52 = vector.extract_strided_slice %39 {offsets = [0, 2], sizes = [8, 1], strides = [1, 1]} : vector<8x3xi32> to vector<8x1xi32>
      %53 = vector.broadcast %52 : vector<8x1xi32> to vector<8x3xi32>
      %54 = arith.cmpi eq, %53, %40 : vector<8x3xi32>
      %55 = arith.extui %54 : vector<8x3xi1> to vector<8x3xi32>
      %56 = arith.addi %51, %55 : vector<8x3xi32>
      %cst_17 = arith.constant dense<-2147483648> : vector<8xi32>
      %57 = vector.multi_reduction <maxsi>, %56, %cst_17 [1] : vector<8x3xi32> to vector<8xi32>
      %58 = vector.shape_cast %57 : vector<8xi32> to vector<8x1xi32>
      %59 = vector.broadcast %58 : vector<8x1xi32> to vector<8x3xi32>
      %60 = arith.cmpi eq, %56, %59 : vector<8x3xi32>
      %c3_i32_18 = arith.constant 3 : i32
      %61 = vector.broadcast %c3_i32_18 : i32 to vector<8x3xi32>
      %62 = arith.select %60, %40, %61 : vector<8x3xi1>, vector<8x3xi32>
      %cst_19 = arith.constant dense<2147483647> : vector<8xi32>
      %63 = vector.multi_reduction <minsi>, %62, %cst_19 [1] : vector<8x3xi32> to vector<8xi32>
      %64 = vector.shape_cast %63 : vector<8xi32> to vector<8x1xi32>
      %65 = vector.shape_cast %64 : vector<8x1xi32> to vector<8x1xi32>
      %66 = vector.broadcast %65 : vector<8x1xi32> to vector<8x128xi32>
      %c0_20 = arith.constant 0 : index
      %c0_21 = arith.constant 0 : index
      %67 = vector.load %arg4[%c0_20, %c0_21] : memref<8x128xi32, #tpu.memory_space<vmem>>, vector<8x128xi32>
      tpu.vector_store %arg4[%c0_20, %c0_21], %66 {strides = array<i32>} : memref<8x128xi32, #tpu.memory_space<vmem>>, vector<8x128xi32>,
    } else {
    }
    return
  }
  func.func @transform_0(%arg0: i32, %arg1: i32) -> (i32, i32) {
    %c0_i32 = arith.constant 0 : i32
    %c0_i32_0 = arith.constant 0 : i32
    return %arg0, %c0_i32 : i32, i32
  }
  func.func @transform_1(%arg0: i32, %arg1: i32) -> (i32, i32) {
    %c0_i32 = arith.constant 0 : i32
    %c0_i32_0 = arith.constant 0 : i32
    return %c0_i32, %arg1 : i32, i32
  }
  func.func @transform_2(%arg0: i32, %arg1: i32) -> (i32, i32) {
    %c0_i32 = arith.constant 0 : i32
    %c0_i32_0 = arith.constant 0 : i32
    return %arg0, %c0_i32 : i32, i32
  }
}

</mosaic_0001>

<llo_original>
// kernel: tpu_custom_call.1
$region0: #{tpu_custom_call.1}
  #allocation0 [shape = 'u32[]', space=smem, size = 0x4, offset = 0x4, fixed_abs, tag = 'smem constant byte address 0x4 - core index']
  #allocation1 [shape = 'u32[144,128]{1,0:T(1,128)}', space=vmem, size = 0x12000, scoped, tag = 'internal scratch']
  #allocation2 [shape = 's32[8,3]{1,0:T(8,128)}', space=vmem, size = 0x1000, scoped, tag = 'scratch operand']
  %s0 = inlined_call_operand.vmem [shape: f32[8,1], index: 0, kind: input, shape index: {}]
  %s1 = inlined_call_operand.vmem [shape: s32[2,128], index: 1, kind: input, shape index: {}]
  %s2 = inlined_call_operand.hbm [shape: s32[8,128], index: 2, kind: output, shape index: {}]
  %s3 = sld [smem:[#allocation0]]
  $region30: #{tpu_custom_call.1} parent=0
    _
  %s5 = ssub.s32 1, %s3
  %s6 = scalar_select 0, %s5, %s3
  $region1: #{tpu_custom_call.1} parent=0
    #allocation3 [shape = 'u8[4096]{0}', space=vmem, size = 0x1000, scoped, tag = 'output window, operand 0, single buffered']
    #allocation4 [shape = 's32[1]{0}', space=sflag, size = 0x4, scoped, tag = 'scoped memory for tpu_custom_call.1']
    %7 = vsyncpa [#allocation4], 0
    // Predicated region
    $region2: #{tpu_custom_call.1} parent=1 // pred_check
      _
    $region3: #{tpu_custom_call.1} parent=1 // pred_check_branch
      %9 = sbr.rel (0) target = $region5
    $region4: #{tpu_custom_call.1} parent=1 // pred_region
      _
    $region5: #{tpu_custom_call.1} parent=1 // pred_fallthru
      _
    // Predicated region
    $region6: #{tpu_custom_call.1} parent=1 // pred_check
      _
    $region7: #{tpu_custom_call.1} parent=1 // pred_check_branch
      %11 = sbr.rel (0) target = $region9
    $region8: #{tpu_custom_call.1} parent=1 // pred_region
      _
    $region9: #{tpu_custom_call.1} parent=1 // pred_fallthru
      _
    %p12 = scmp.eq.s32.totalorder 0, 0
    // Predicated region
    $region10: #{tpu_custom_call.1} parent=1 // pred_check
      %p13 = pneg %p12
    $region11: #{tpu_custom_call.1} parent=1 // pred_check_branch
      %15 = sbr.rel (%p13) target = $region13
    $region12: #{tpu_custom_call.1} parent=1 // pred_region
      %vm16 = vcmask 23552
      %17 = vst.msk [vmem:[#allocation2] sm:$0xff] %vm16, 2147483647
    $region13: #{tpu_custom_call.1} parent=1 // pred_fallthru
      _
    %v18 = vld [vmem:[%s1] sm:$0x1]
    %v20 = vld [vmem:[%s1 + $0x1] sm:$0x1]
    %v21 = vld [vmem:[%s0] sm:$0xff]
    %23 = vset.pattern.permute.xlu0 0
    %24 = vperm.xlu0 %23, %v21
    %v25 = vpop.permute.xlu0 %24
    %v27 = vlaneseq
    %v28 = vshrl.u32 %v27, 7
    %v29 = vsub.s32 0, %v28
    %v30 = vrot.slane %v18, %v29
    %v31 = vsub.f32 %v25, %v30
    %v32 = vand.u32 2147483647, %v31
    %vm34 = vcmp.lt.s32.totalorder %v32, 2147482624
    %v35 = vsel %vm34, %v32, 2147482624
    %v36 = vand.u32 %v35, 4294966784
    %v37 = vlaneseq
    %v38 = vshrl.u32 %v37, 7
    %v39 = vsub.s32 0, %v38
    %v40 = vrot.slane %v20, %v39
    %v41 = vor.u32 %v36, %v40
    %v42 = vld [vmem:[#allocation2] sm:$0xff]
    %vm43 = vcmask 23552
    %v44 = vsel %vm43, %v42, 2147483648
    %v45 = vand.u32 %v44, 65535
    %v46 = vshra.s32 %v44, 16
    %v47 = vcvt.s32.f32 %v45
    %v48 = vcvt.s32.f32 %v46
    %49 = vmax.xlane.f32.xlu0 %v48
    %v50 = vpop.xlane.xlu0 %49
    %vm51 = vcmp.eq.f32.partialorder %v48, %v50
    %v52 = vsel %vm51, %v47, -inf
    %53 = vmax.xlane.f32.xlu0 %v52
    %v54 = vpop.xlane.xlu0 %53
    %v55 = vcvt.f32.s32 %v54
    %v56 = vcvt.f32.s32 %v50
    %v57 = vshll.u32 %v56, 16
    %v58 = vadd.s32 %v57, %v55
    %v59 = vand.u32 %v41, 65535
    %v60 = vshra.s32 %v41, 16
    %v61 = vcvt.s32.f32 %v59
    %v62 = vcvt.s32.f32 %v60
    %63 = vmin.xlane.f32.xlu0 %v62
    %v64 = vpop.xlane.xlu0 %63
    %vm65 = vcmp.eq.f32.partialorder %v62, %v64
    %v66 = vsel %vm65, %v61, inf
    %67 = vmin.xlane.f32.xlu0 %v66
    %v68 = vpop.xlane.xlu0 %67
    %v69 = vcvt.f32.s32 %v68
    %v70 = vcvt.f32.s32 %v64
    %v71 = vshll.u32 %v70, 16
    %v72 = vadd.s32 %v71, %v69
    %vm73 = vcmp.lt.s32.totalorder %v72, %v58
    %v74 = vsel %vm73, 1, 0
    %v75 = vrot.slane %v74, 4
    %vm76 = vcmp.gt.s32.totalorder %v74, %v75
    %v77 = vsel %vm76, %v74, %v75
    %v78 = vrot.slane %v77, 2
    %vm79 = vcmp.gt.s32.totalorder %v77, %v78
    %v80 = vsel %vm79, %v77, %v78
    %v81 = vrot.slane %v80, 1
    %vm82 = vcmp.gt.s32.totalorder %v80, %v81
    %v83 = vsel %vm82, %v80, %v81
    %s84 = vtos %v83
    %p85 = scmp.gt.s32.totalorder %s84, 0
    // Predicated region
    $region14: #{tpu_custom_call.1} parent=1 // pred_check
      %p86 = pneg %p85
    $region15: #{tpu_custom_call.1} parent=1 // pred_check_branch
      %88 = sbr.rel (%p86) target = $region17
    $region16: #{tpu_custom_call.1} parent=1 // pred_region
      %v89 = vlaneseq
      %v90 = vand.u32 %v89, 127
      %vm91 = vcmp.gt.s32.totalorder %v41, 4294967295
      %v92 = vsel %vm91, %v41, 2147483647
      %v93 = vand.u32 %v92, 65535
      %v94 = vshra.s32 %v92, 16
      %v95 = vcvt.s32.f32 %v93
      %v96 = vcvt.s32.f32 %v94
      %97 = vmin.xlane.f32.xlu0 %v96
      %v98 = vpop.xlane.xlu0 %97
      %vm99 = vcmp.eq.f32.partialorder %v96, %v98
      %v100 = vsel %vm99, %v95, inf
      %101 = vmin.xlane.f32.xlu0 %v100
      %v102 = vpop.xlane.xlu0 %101
      %v103 = vcvt.f32.s32 %v102
      %v104 = vcvt.f32.s32 %v98
      %v105 = vshll.u32 %v104, 16
      %v106 = vadd.s32 %v105, %v103
      %v107 = vsel %vm43, %v42, 2147483647
      %v108 = vand.u32 %v107, 65535
      %v109 = vshra.s32 %v107, 16
      %v110 = vcvt.s32.f32 %v108
      %v111 = vcvt.s32.f32 %v109
      %112 = vmin.xlane.f32.xlu0 %v111
      %v113 = vpop.xlane.xlu0 %112
      %vm114 = vcmp.eq.f32.partialorder %v111, %v113
      %v115 = vsel %vm114, %v110, inf
      %116 = vmin.xlane.f32.xlu0 %v115
      %v117 = vpop.xlane.xlu0 %116
      %v118 = vcvt.f32.s32 %v117
      %v119 = vcvt.f32.s32 %v113
      %v120 = vshll.u32 %v119, 16
      %v121 = vadd.s32 %v120, %v118
      %vm122 = vcmp.lt.s32.totalorder %v106, %v121
      %v123 = vsel %vm122, %v106, %v121
      %vm124 = vcmp.eq.s32.totalorder %v90, 0
      %v125 = vsel %vm124, %v123, 2147483647
      %vm126 = vcmp.eq.s32.totalorder %v42, %v123
      %v127 = vsel %vm126, 2147483647, %v42
      %vm128 = vcmp.gt.s32.totalorder %v41, %v123
      %v129 = vsel %vm128, %v41, 2147483647
      %v130 = vand.u32 %v129, 65535
      %v131 = vshra.s32 %v129, 16
      %v132 = vcvt.s32.f32 %v130
      %v133 = vcvt.s32.f32 %v131
      %134 = vmin.xlane.f32.xlu0 %v133
      %v135 = vpop.xlane.xlu0 %134
      %vm136 = vcmp.eq.f32.partialorder %v133, %v135
      %v137 = vsel %vm136, %v132, inf
      %138 = vmin.xlane.f32.xlu0 %v137
      %v139 = vpop.xlane.xlu0 %138
      %v140 = vcvt.f32.s32 %v139
      %v141 = vcvt.f32.s32 %v135
      %v142 = vshll.u32 %v141, 16
      %v143 = vadd.s32 %v142, %v140
      %v144 = vsel %vm43, %v127, 2147483647
      %v145 = vand.u32 %v144, 65535
      %v146 = vshra.s32 %v144, 16
      %v147 = vcvt.s32.f32 %v145
      %v148 = vcvt.s32.f32 %v146
      %149 = vmin.xlane.f32.xlu0 %v148
      %v150 = vpop.xlane.xlu0 %149
      %vm151 = vcmp.eq.f32.partialorder %v148, %v150
      %v152 = vsel %vm151, %v147, inf
      %153 = vmin.xlane.f32.xlu0 %v152
      %v154 = vpop.xlane.xlu0 %153
      %v155 = vcvt.f32.s32 %v154
      %v156 = vcvt.f32.s32 %v150
      %v157 = vshll.u32 %v156, 16
      %v158 = vadd.s32 %v157, %v155
      %vm159 = vcmp.lt.s32.totalorder %v143, %v158
      %v160 = vsel %vm159, %v143, %v158
      %vm161 = vcmp.eq.s32.totalorder %v90, 1
      %v162 = vsel %vm161, %v160, %v125
      %vm163 = vcmp.eq.s32.totalorder %v127, %v160
      %v164 = vsel %vm163, 2147483647, %v127
      %vm165 = vcmp.gt.s32.totalorder %v41, %v160
      %v166 = vsel %vm165, %v41, 2147483647
      %v167 = vand.u32 %v166, 65535
      %v168 = vshra.s32 %v166, 16
      %v169 = vcvt.s32.f32 %v167
      %v170 = vcvt.s32.f32 %v168
      %171 = vmin.xlane.f32.xlu0 %v170
      %v172 = vpop.xlane.xlu0 %171
      %vm173 = vcmp.eq.f32.partialorder %v170, %v172
      %v174 = vsel %vm173, %v169, inf
      %175 = vmin.xlane.f32.xlu0 %v174
      %v176 = vpop.xlane.xlu0 %175
      %v177 = vcvt.f32.s32 %v176
      %v178 = vcvt.f32.s32 %v172
      %v179 = vshll.u32 %v178, 16
      %v180 = vadd.s32 %v179, %v177
      %v181 = vsel %vm43, %v164, 2147483647
      %v182 = vand.u32 %v181, 65535
      %v183 = vshra.s32 %v181, 16
      %v184 = vcvt.s32.f32 %v182
      %v185 = vcvt.s32.f32 %v183
      %186 = vmin.xlane.f32.xlu0 %v185
      %v187 = vpop.xlane.xlu0 %186
      %vm188 = vcmp.eq.f32.partialorder %v185, %v187
      %v189 = vsel %vm188, %v184, inf
      %190 = vmin.xlane.f32.xlu0 %v189
      %v191 = vpop.xlane.xlu0 %190
      %v192 = vcvt.f32.s32 %v191
      %v193 = vcvt.f32.s32 %v187
      %v194 = vshll.u32 %v193, 16
      %v195 = vadd.s32 %v194, %v192
      %vm196 = vcmp.lt.s32.totalorder %v180, %v195
      %v197 = vsel %vm196, %v180, %v195
      %vm198 = vcmp.eq.s32.totalorder %v90, 2
      %v199 = vsel %vm198, %v197, %v162
      %200 = vst.msk [vmem:[#allocation2] sm:$0xff] %vm43, %v199
    $region17: #{tpu_custom_call.1} parent=1 // pred_fallthru
      _
    // Predicated region
    $region18: #{tpu_custom_call.1} parent=1 // pred_check
      %p201 = pneg %p12
    $region19: #{tpu_custom_call.1} parent=1 // pred_check_branch
      %203 = sbr.rel (%p201) target = $region21
    $region20: #{tpu_custom_call.1} parent=1 // pred_region
      %v204 = vld [vmem:[#allocation2] sm:$0xff]
      %v205 = vand.u32 %v204, 3
      %v206 = vlaneseq
      %v207 = vand.u32 %v206, 127
      %208 = vset.pattern.permute.xlu0 0
      %209 = vperm.xlu0 %208, %v205
      %v210 = vpop.permute.xlu0 %209
      %vm211 = vcmp.eq.s32.totalorder %v210, %v207
      %v212 = vsel %vm211, 1, 0
      %213 = vset.pattern.permute.xlu0 1
      %214 = vperm.xlu0 %213, %v205
      %v215 = vpop.permute.xlu0 %214
      %vm216 = vcmp.eq.s32.totalorder %v215, %v207
      %v217 = vsel %vm216, 1, 0
      %v218 = vadd.s32 %v212, %v217
      %219 = vset.pattern.permute.xlu0 2
      %220 = vperm.xlu0 %219, %v205
      %v221 = vpop.permute.xlu0 %220
      %vm222 = vcmp.eq.s32.totalorder %v221, %v207
      %v223 = vsel %vm222, 1, 0
      %v224 = vadd.s32 %v218, %v223
      %v225 = vsel %vm43, %v224, 2147483648
      %v226 = vand.u32 %v225, 65535
      %v227 = vshra.s32 %v225, 16
      %v228 = vcvt.s32.f32 %v226
      %v229 = vcvt.s32.f32 %v227
      %230 = vmax.xlane.f32.xlu0 %v229
      %v231 = vpop.xlane.xlu0 %230
      %vm232 = vcmp.eq.f32.partialorder %v229, %v231
      %v233 = vsel %vm232, %v228, -inf
      %234 = vmax.xlane.f32.xlu0 %v233
      %v235 = vpop.xlane.xlu0 %234
      %v236 = vcvt.f32.s32 %v235
      %v237 = vcvt.f32.s32 %v231
      %v238 = vshll.u32 %v237, 16
      %v239 = vadd.s32 %v238, %v236
      %vm240 = vcmp.eq.s32.totalorder %v224, %v239
      %v241 = vsel %vm240, %v207, 3
      %v242 = vsel %vm43, %v241, 2147483647
      %v243 = vand.u32 %v242, 65535
      %v244 = vshra.s32 %v242, 16
      %v245 = vcvt.s32.f32 %v243
      %v246 = vcvt.s32.f32 %v244
      %247 = vmin.xlane.f32.xlu0 %v246
      %v248 = vpop.xlane.xlu0 %247
      %vm249 = vcmp.eq.f32.partialorder %v246, %v248
      %v250 = vsel %vm249, %v245, inf
      %251 = vmin.xlane.f32.xlu0 %v250
      %v252 = vpop.xlane.xlu0 %251
      %v253 = vcvt.f32.s32 %v252
      %v254 = vcvt.f32.s32 %v248
      %v255 = vshll.u32 %v254, 16
      %v256 = vadd.s32 %v255, %v253
      %257 = vst [vmem:[#allocation3] sm:$0xff] %v256
    $region21: #{tpu_custom_call.1} parent=1 // pred_fallthru
      _
    // Predicated region
    $region22: #{tpu_custom_call.1} parent=1 // pred_check
      _
    $region23: #{tpu_custom_call.1} parent=1 // pred_check_branch
      %259 = sbr.rel (0) target = $region25
    $region24: #{tpu_custom_call.1} parent=1 // pred_region
      %s261 = ssub.s32 128, 128
      %262 = vsyncadd [#allocation4], %s261
      %s264 = sshll.u32 [#allocation3], 4
      %s265 = int_to_ptr.vmem [resolvable:$true] %s264
      %267 = dma.vmem_to_hbm [thread:$0]  %s265, 128, %s2, [#allocation4]
    $region25: #{tpu_custom_call.1} parent=1 // pred_fallthru
      _
    // Predicated region
    $region26: #{tpu_custom_call.1} parent=1 // pred_check
      _
    $region27: #{tpu_custom_call.1} parent=1 // pred_check_branch
      %269 = sbr.rel (0) target = $region29
    $region28: #{tpu_custom_call.1} parent=1 // pred_region
      %270 = dma.done [#allocation4], 128
    $region29: #{tpu_custom_call.1} parent=1 // pred_fallthru
      _
    %271 = vsyncpa [#allocation4], 1

</llo_original>
